<compile_context>
chip_gen: v7x
topology: tpu7x:2x2x1
jax: 0.10.0
libtpu: 0.0.40
codegen_flags: <defaults>
</compile_context>

<pallas_src>
import math

import numpy as np

import jax
import jax.numpy as jnp
from jax.experimental import pallas as pl
from jax.experimental.pallas import tpu as pltpu

_TWO_PI = 2.0 * math.pi
_TB_MAX = 2048  # batch tile (sublanes); budget counts the lane-padded x tile


def _round_up(n, m):
    return -(-n // m) * m


def _gfp_kernel(x_ref, w_ref, out_ref):
    # x_ref: (tb, 1) f32, w_ref: (1, H) f32, out_ref: (tb, 2H) out_dtype
    H = w_ref.shape[1]
    # Fold 2*pi into the (1, H) W tile: H multiplies per tile, not tb*H.
    w2 = w_ref[...] * _TWO_PI                 # (1, H)
    proj = x_ref[...] * w2                    # (tb, H) VPU broadcast multiply
    s = jnp.sin(proj)                         # EUP / transcendental path
    c = jnp.cos(proj)
    if H % 128 == 0:
        # Both halves start lane-aligned: two unmasked full-lane stores.
        out_ref[:, :H] = s.astype(out_ref.dtype)
        out_ref[:, H:] = c.astype(out_ref.dtype)
    else:
        # Keep the store unmasked: pay one XLU concat, do a single
        # full-width (tb, 2H) store instead of a lane-misaligned cos store.
        out_ref[...] = jnp.concatenate([s, c], axis=-1).astype(out_ref.dtype)


def gaussian_fourier_projection(x, W, out_dtype=jnp.float32):
    """x: (B,) float, W: (H,) float  ->  (B, 2*H) out_dtype."""
    B = x.shape[0]
    H = W.shape[0]

    x2d = x.astype(jnp.float32).reshape(B, 1)
    w2d = W.astype(jnp.float32).reshape(1, H)

    # Batch tile: a multiple of 8 sublanes.  For B > 16, force >= 2 grid
    # steps so "parallel" batch tiles can shard across both v7x TensorCores
    # (no-op on v5e/v6e).  The final block may be partial (Pallas masks it);
    # no padding, no output slice.
    b8 = _round_up(B, 8)
    if b8 <= 16:
        tb = b8
    else:
        tb = min(_TB_MAX, _round_up(pl.cdiv(b8, 2), 8))
    grid = (pl.cdiv(B, tb),)

    out_bytes = B * 2 * H * jnp.dtype(out_dtype).itemsize
    return pl.pallas_call(
        _gfp_kernel,
        out_shape=jax.ShapeDtypeStruct((B, 2 * H), out_dtype),
        grid=grid,
        in_specs=[
            pl.BlockSpec((tb, 1), lambda i: (i, 0)),   # x: one batch tile per step
            pl.BlockSpec((1, H), lambda i: (0, 0)),    # W: resident across tiles
        ],
        out_specs=pl.BlockSpec((tb, 2 * H), lambda i: (i, 0)),
        compiler_params=pltpu.CompilerParams(
            dimension_semantics=("parallel",),
        ),
        cost_estimate=pl.CostEstimate(
            flops=2 * B * H,
            transcendentals=2 * B * H,
            bytes_accessed=4 * B + 4 * H + out_bytes,
        ),
    )(x2d, w2d)


if __name__ == "__main__":
    key = jax.random.PRNGKey(0)
    k_w, k_x = jax.random.split(key)

    embed_dim = 256            # -> H = 128, lane-aligned halves
    scale = 30.0
    B = 8                      # small batch of time steps

    # Deterministic parameter init (mirrors torch.randn(embed_dim//2) * scale).
    W = jax.random.normal(k_w, (embed_dim // 2,), dtype=jnp.float32) * scale
    # Example "time step" inputs.
    x = jax.random.uniform(k_x, (B,), dtype=jnp.float32)

    out = gaussian_fourier_projection(x, W)
    out = jax.block_until_ready(out)
    assert out.shape == (B, embed_dim), out.shape

    # Float64 reference of the forward-pass semantics.  With scale=30 the
    # sin/cos arguments are O(100); a few ulps of f32 rounding in the argument
    # is an irreducible |arg| * eps_f32 absolute error in sin/cos, so the
    # tolerance is derived from the argument magnitude.
    x64 = np.asarray(x, dtype=np.float64)
    W64 = np.asarray(W, dtype=np.float64)
    proj64 = x64[:, None] * W64[None, :] * 2.0 * np.pi
    ref = np.concatenate([np.sin(proj64), np.cos(proj64)], axis=-1)
    max_arg = float(np.max(np.abs(proj64)))
    atol = max(1e-4, 32.0 * max_arg * float(np.finfo(np.float32).eps))
    assert np.allclose(np.asarray(out, dtype=np.float64), ref, atol=atol, rtol=0.0), (
        float(np.max(np.abs(np.asarray(out, dtype=np.float64) - ref))), atol)

    print("KERNEL_OK")
</pallas_src>

<mosaic_0001>
module attributes {stable_mosaic.version = 11 : i64} {
  func.func @_gfp_kernel(%arg0: i32, %arg1: memref<8x1xf32, #tpu.memory_space<vmem>>, %arg2: memref<1x128xf32, #tpu.memory_space<vmem>>, %arg3: memref<8x256xf32, #tpu.memory_space<vmem>>) attributes {dimension_semantics = [#tpu.dimension_semantics<parallel>], iteration_bounds = array<i64: 1>, scalar_prefetch = 0 : i64, scratch_operands = 0 : i64, tpu.core_type = #tpu.core_type<tc>, window_params = [{transform_indices = @transform_0, window_bounds = array<i64: 8, 1>}, {pipeline_mode = #tpu.pipeline_mode<synchronous>, transform_indices = @transform_1, window_bounds = array<i64: 1, 128>}, {transform_indices = @transform_2, window_bounds = array<i64: 8, 256>}]} {
    %c0 = arith.constant 0 : index
    %c0_0 = arith.constant 0 : index
    %0 = vector.load %arg2[%c0, %c0_0] : memref<1x128xf32, #tpu.memory_space<vmem>>, vector<1x128xf32>
    %cst = arith.constant 6.28318548 : f32
    %1 = vector.broadcast %cst : f32 to vector<1x128xf32>
    %2 = arith.mulf %0, %1 : vector<1x128xf32>
    %c0_1 = arith.constant 0 : index
    %c0_2 = arith.constant 0 : index
    %3 = vector.load %arg1[%c0_1, %c0_2] : memref<8x1xf32, #tpu.memory_space<vmem>>, vector<8x1xf32>
    %4 = vector.broadcast %3 : vector<8x1xf32> to vector<8x128xf32>
    %5 = vector.broadcast %2 : vector<1x128xf32> to vector<8x128xf32>
    %6 = arith.mulf %4, %5 : vector<8x128xf32>
    %7 = math.sin %6 : vector<8x128xf32>
    %8 = math.cos %6 : vector<8x128xf32>
    %c0_3 = arith.constant 0 : index
    %c0_4 = arith.constant 0 : index
    %9 = vector.load %arg3[%c0_3, %c0_4] : memref<8x256xf32, #tpu.memory_space<vmem>>, vector<8x128xf32>
    tpu.vector_store %arg3[%c0_3, %c0_4], %7 {strides = array<i32>} : memref<8x256xf32, #tpu.memory_space<vmem>>, vector<8x128xf32>,
    %c0_5 = arith.constant 0 : index
    %c128 = arith.constant 128 : index
    %10 = vector.load %arg3[%c0_5, %c128] : memref<8x256xf32, #tpu.memory_space<vmem>>, vector<8x128xf32>
    tpu.vector_store %arg3[%c0_5, %c128], %8 {strides = array<i32>} : memref<8x256xf32, #tpu.memory_space<vmem>>, vector<8x128xf32>,
    return
  }
  func.func @transform_0(%arg0: i32) -> (i32, i32) {
    %c0_i32 = arith.constant 0 : i32
    %c0_i32_0 = arith.constant 0 : i32
    return %arg0, %c0_i32 : i32, i32
  }
  func.func @transform_1(%arg0: i32) -> (i32, i32) {
    %c0_i32 = arith.constant 0 : i32
    %c0_i32_0 = arith.constant 0 : i32
    %c0_i32_1 = arith.constant 0 : i32
    return %c0_i32, %c0_i32_0 : i32, i32
  }
  func.func @transform_2(%arg0: i32) -> (i32, i32) {
    %c0_i32 = arith.constant 0 : i32
    %c0_i32_0 = arith.constant 0 : i32
    return %arg0, %c0_i32 : i32, i32
  }
}

</mosaic_0001>

<llo_original>
// kernel: tpu_custom_call.1
$region0: #{tpu_custom_call.1}
  #allocation0 [shape = 'u32[]', space=smem, size = 0x4, offset = 0x4, fixed_abs, tag = 'smem constant byte address 0x4 - core index']
  #allocation1 [shape = 'u32[144,128]{1,0:T(1,128)}', space=vmem, size = 0x12000, scoped, tag = 'internal scratch']
  %s0 = inlined_call_operand.vmem [shape: f32[8,1], index: 0, kind: input, shape index: {}]
  %s1 = inlined_call_operand.vmem [shape: f32[1,128], index: 1, kind: input, shape index: {}]
  %s2 = inlined_call_operand.hbm [shape: f32[8,256], index: 2, kind: output, shape index: {}]
  %s3 = sld [smem:[#allocation0]]
  $region18: #{tpu_custom_call.1} parent=0
    _
  %s5 = ssub.s32 1, %s3
  %s6 = scalar_select 0, %s5, %s3
  $region1: #{tpu_custom_call.1} parent=0
    #allocation2 [shape = 'u8[8192]{0}', space=vmem, size = 0x2000, scoped, tag = 'output window, operand 0, single buffered']
    #allocation3 [shape = 's32[1]{0}', space=sflag, size = 0x4, scoped, tag = 'scoped memory for tpu_custom_call.1']
    %7 = vsyncpa [#allocation3], 0
    // Predicated region
    $region2: #{tpu_custom_call.1} parent=1 // pred_check
      _
    $region3: #{tpu_custom_call.1} parent=1 // pred_check_branch
      %9 = sbr.rel (0) target = $region5
    $region4: #{tpu_custom_call.1} parent=1 // pred_region
      _
    $region5: #{tpu_custom_call.1} parent=1 // pred_fallthru
      _
    // Predicated region
    $region6: #{tpu_custom_call.1} parent=1 // pred_check
      _
    $region7: #{tpu_custom_call.1} parent=1 // pred_check_branch
      %11 = sbr.rel (0) target = $region9
    $region8: #{tpu_custom_call.1} parent=1 // pred_region
      _
    $region9: #{tpu_custom_call.1} parent=1 // pred_fallthru
      _
    %v12 = vld [vmem:[%s1] sm:$0x1]
    %v13 = vmul.f32 %v12, 6.2831855
    %v14 = vld [vmem:[%s0] sm:$0xff]
    %16 = vset.pattern.permute.xlu0 0
    %17 = vperm.xlu0 %16, %v14
    %v18 = vpop.permute.xlu0 %17
    %v21 = vlaneseq
    %v22 = vshrl.u32 %v21, 7
    %v23 = vsub.s32 0, %v22
    %v24 = vrot.slane %v13, %v23
    %v26 = vmul.f32 %v18, %v24
    %v27 = vand.u32 2147483647, %v26
    %vm28 = vcmp.le.f32.partialorder %v27, 0.7853982
    %vm29 = vcmp.lt.s32.totalorder %v26, 0
    %v30 = vand.u32 %v26, 2139095040
    %v31 = vshrl.u32 %v30, 23
    %v32 = vsub.s32 %v31, 127
    %v33 = vand.u32 2147483647, %v26
    %v34 = vand.u32 %v33, 8388607
    %v35 = vor.u32 %v34, 8388608
    %v36 = vsub.s32 0, %v35
    %v37 = vadd.s32 %v32, 1
    %vm38 = vcmp.gt.s32.totalorder %v37, 0
    %v39 = vsel %vm38, %v37, 0
    %v40 = vshrl.u32 %v39, 5
    %v41 = vand.u32 %v39, 31
    %v42 = vsub.s32 32, %v41
    %v43 = vshrl.u32 683565275, %v42
    %v44 = vshll.u32 683565275, %v41
    %v45 = vshrl.u32 2475754826, %v42
    %v46 = vor.u32 %v44, %v45
    %v47 = vshll.u32 2475754826, %v41
    %v48 = vshrl.u32 2131351028, %v42
    %v49 = vor.u32 %v47, %v48
    %v50 = vshll.u32 2131351028, %v41
    %v51 = vshrl.u32 2102212464, %v42
    %v52 = vor.u32 %v50, %v51
    %v53 = vshll.u32 2102212464, %v41
    %v54 = vshrl.u32 920167782, %v42
    %v55 = vor.u32 %v53, %v54
    %v56 = vshll.u32 920167782, %v41
    %v57 = vshrl.u32 1326507024, %v42
    %v58 = vor.u32 %v56, %v57
    %vm59 = vcmp.lt.s32.totalorder %v40, 1
    %vm60 = vcmp.lt.s32.totalorder %v40, 2
    %vm61 = vcmp.lt.s32.totalorder %v40, 3
    %vm62 = vcmp.lt.s32.totalorder %v40, 4
    %v63 = vsel %vm59, %v43, %v46
    %v64 = vsel %vm62, %v52, 2102212464
    %v65 = vsel %vm61, %v49, %v64
    %v66 = vsel %vm60, %v63, %v65
    %v67 = vsel %vm59, %v46, %v49
    %v68 = vsel %vm62, %v55, 920167782
    %v69 = vsel %vm61, %v52, %v68
    %v70 = vsel %vm60, %v67, %v69
    %v71 = vsel %vm59, %v49, %v52
    %v72 = vsel %vm62, %v58, 1326507024
    %v73 = vsel %vm61, %v55, %v72
    %v74 = vsel %vm60, %v71, %v73
    %v75 = vshll.u32 %v35, 8
    %v76 = vmul.u32.u64.compose %v75, %v74
    %v77 = vextract.low.u32 %v76
    %v78 = vextract.high.u32 %v76
    %v79 = vmul.u32.u64.compose %v75, %v70
    %v80 = vextract.low.u32 %v79
    %v81 = vextract.high.u32 %v79
    %v82 = vmul.u32 %v75, %v66
    %v83 = vadd.s32 %v78, %v80
    %vm84 = vc.u32 %v78, %v80
    %v85 = vadd.s32 %v81, 1
    %v86 = vsel %vm84, %v85, %v81
    %v87 = vadd.s32 %v82, %v86
    %v88 = vadd.s32 %v87, 536870912
    %v89 = vshrl.u32 %v88, 30
    %v90 = vshll.u32 %v89, 30
    %v91 = vsub.s32 %v87, %v90
    %vm92 = vcmp.lt.s32.totalorder %v91, 0
    %v93 = vsub.s32 0, %v91
    %v94 = vsel %vm92, %v93, %v91
    %v95 = vclz %v94
    %v96 = vsub.s32 %v95, 2
    %vm97 = vcmp.gt.s32.totalorder 0, %v96
    %v98 = vsel %vm97, 0, %v96
    %v99 = vsub.s32 32, %v98
    %v100 = vshll.u32 %v91, %v98
    %v101 = vshrl.u32 %v83, %v99
    %v102 = vor.u32 %v100, %v101
    %v103 = vsub.s32 4294967266, %v98
    %v104 = vadd.s32 %v103, 127
    %v105 = vshll.u32 %v104, 23
    %v106 = vor.u32 4788187, %v105
    %v107 = vand.u32 2147483647, %v106
    %v109 = vcvt.s32.f32 %v102
    %v110 = vmul.f32 %v109, %v107
    %v111 = vxor.u32 %v110, 2147483648
    %v112 = vsel %vm29, %v111, %v110
    %v113 = vsub.s32 4, %v89
    %v114 = vsel %vm29, %v113, %v89
    %v115 = vsel %vm28, %v26, %v112
    %v116 = vsel %vm28, 0, %v114
    %v117 = vcosq.f32.pop %v115
    %v118 = vsinq.f32.pop %v115
    %vm119 = vweird.f32 %v26
    %v120 = vadd.s32 %v116, 3
    %v121 = vand.u32 %v120, 3
    %vm122 = vcmp.lt.s32.totalorder %v121, 2
    %vm123 = vcmp.eq.s32.totalorder %v121, 0
    %v124 = vxor.u32 %v118, 2147483648
    %v125 = vsel %vm123, %v117, %v124
    %vm126 = vcmp.eq.s32.totalorder %v121, 2
    %v127 = vxor.u32 %v117, 2147483648
    %v128 = vsel %vm126, %v127, %v118
    %v129 = vsel %vm122, %v125, %v128
    %v130 = vsel %vm119, nan, %v129
    %v131 = vand.u32 2147483647, %v26
    %vm132 = vcmp.le.f32.partialorder %v131, 0.7853982
    %vm133 = vcmp.lt.s32.totalorder %v26, 0
    %v134 = vand.u32 %v26, 2139095040
    %v135 = vshrl.u32 %v134, 23
    %v136 = vsub.s32 %v135, 127
    %v137 = vand.u32 2147483647, %v26
    %v138 = vand.u32 %v137, 8388607
    %v139 = vor.u32 %v138, 8388608
    %v140 = vsub.s32 0, %v139
    %v141 = vadd.s32 %v136, 1
    %vm142 = vcmp.gt.s32.totalorder %v141, 0
    %v143 = vsel %vm142, %v141, 0
    %v144 = vshrl.u32 %v143, 5
    %v145 = vand.u32 %v143, 31
    %v146 = vsub.s32 32, %v145
    %v147 = vshrl.u32 683565275, %v146
    %v148 = vshll.u32 683565275, %v145
    %v149 = vshrl.u32 2475754826, %v146
    %v150 = vor.u32 %v148, %v149
    %v151 = vshll.u32 2475754826, %v145
    %v152 = vshrl.u32 2131351028, %v146
    %v153 = vor.u32 %v151, %v152
    %v154 = vshll.u32 2131351028, %v145
    %v155 = vshrl.u32 2102212464, %v146
    %v156 = vor.u32 %v154, %v155
    %v157 = vshll.u32 2102212464, %v145
    %v158 = vshrl.u32 920167782, %v146
    %v159 = vor.u32 %v157, %v158
    %v160 = vshll.u32 920167782, %v145
    %v161 = vshrl.u32 1326507024, %v146
    %v162 = vor.u32 %v160, %v161
    %vm163 = vcmp.lt.s32.totalorder %v144, 1
    %vm164 = vcmp.lt.s32.totalorder %v144, 2
    %vm165 = vcmp.lt.s32.totalorder %v144, 3
    %vm166 = vcmp.lt.s32.totalorder %v144, 4
    %v167 = vsel %vm163, %v147, %v150
    %v168 = vsel %vm166, %v156, 2102212464
    %v169 = vsel %vm165, %v153, %v168
    %v170 = vsel %vm164, %v167, %v169
    %v171 = vsel %vm163, %v150, %v153
    %v172 = vsel %vm166, %v159, 920167782
    %v173 = vsel %vm165, %v156, %v172
    %v174 = vsel %vm164, %v171, %v173
    %v175 = vsel %vm163, %v153, %v156
    %v176 = vsel %vm166, %v162, 1326507024
    %v177 = vsel %vm165, %v159, %v176
    %v178 = vsel %vm164, %v175, %v177
    %v179 = vshll.u32 %v139, 8
    %v180 = vmul.u32.u64.compose %v179, %v178
    %v181 = vextract.low.u32 %v180
    %v182 = vextract.high.u32 %v180
    %v183 = vmul.u32.u64.compose %v179, %v174
    %v184 = vextract.low.u32 %v183
    %v185 = vextract.high.u32 %v183
    %v186 = vmul.u32 %v179, %v170
    %v187 = vadd.s32 %v182, %v184
    %vm188 = vc.u32 %v182, %v184
    %v189 = vadd.s32 %v185, 1
    %v190 = vsel %vm188, %v189, %v185
    %v191 = vadd.s32 %v186, %v190
    %v192 = vadd.s32 %v191, 536870912
    %v193 = vshrl.u32 %v192, 30
    %v194 = vshll.u32 %v193, 30
    %v195 = vsub.s32 %v191, %v194
    %vm196 = vcmp.lt.s32.totalorder %v195, 0
    %v197 = vsub.s32 0, %v195
    %v198 = vsel %vm196, %v197, %v195
    %v199 = vclz %v198
    %v200 = vsub.s32 %v199, 2
    %vm201 = vcmp.gt.s32.totalorder 0, %v200
    %v202 = vsel %vm201, 0, %v200
    %v203 = vsub.s32 32, %v202
    %v204 = vshll.u32 %v195, %v202
    %v205 = vshrl.u32 %v187, %v203
    %v206 = vor.u32 %v204, %v205
    %v207 = vsub.s32 4294967266, %v202
    %v208 = vadd.s32 %v207, 127
    %v209 = vshll.u32 %v208, 23
    %v210 = vor.u32 4788187, %v209
    %v211 = vand.u32 2147483647, %v210
    %v213 = vcvt.s32.f32 %v206
    %v214 = vmul.f32 %v213, %v211
    %v215 = vxor.u32 %v214, 2147483648
    %v216 = vsel %vm133, %v215, %v214
    %v217 = vsub.s32 4, %v193
    %v218 = vsel %vm133, %v217, %v193
    %v219 = vsel %vm132, %v26, %v216
    %v220 = vsel %vm132, 0, %v218
    %v221 = vcosq.f32.pop %v219
    %v222 = vsinq.f32.pop %v219
    %vm223 = vweird.f32 %v26
    %v224 = vand.u32 %v220, 3
    %vm225 = vcmp.lt.s32.totalorder %v224, 2
    %vm226 = vcmp.eq.s32.totalorder %v224, 0
    %v227 = vxor.u32 %v222, 2147483648
    %v228 = vsel %vm226, %v221, %v227
    %vm229 = vcmp.eq.s32.totalorder %v224, 2
    %v230 = vxor.u32 %v221, 2147483648
    %v231 = vsel %vm229, %v230, %v222
    %v232 = vsel %vm225, %v228, %v231
    %v233 = vsel %vm223, nan, %v232
    %234 = vst [vmem:[#allocation2] sm:$0xff] %v130
    %235 = vst [vmem:[#allocation2 + $0x8] sm:$0xff] %v233
    // Predicated region
    $region10: #{tpu_custom_call.1} parent=1 // pred_check
      _
    $region11: #{tpu_custom_call.1} parent=1 // pred_check_branch
      %237 = sbr.rel (0) target = $region13
    $region12: #{tpu_custom_call.1} parent=1 // pred_region
      %s239 = ssub.s32 256, 256
      %240 = vsyncadd [#allocation3], %s239
      %s242 = sshll.u32 [#allocation2], 4
      %s243 = int_to_ptr.vmem [resolvable:$true] %s242
      %245 = dma.vmem_to_hbm [thread:$0]  %s243, 256, %s2, [#allocation3]
    $region13: #{tpu_custom_call.1} parent=1 // pred_fallthru
      _
    // Predicated region
    $region14: #{tpu_custom_call.1} parent=1 // pred_check
      _
    $region15: #{tpu_custom_call.1} parent=1 // pred_check_branch
      %247 = sbr.rel (0) target = $region17
    $region16: #{tpu_custom_call.1} parent=1 // pred_region
      %248 = dma.done [#allocation3], 256
    $region17: #{tpu_custom_call.1} parent=1 // pred_fallthru
      _
    %249 = vsyncpa [#allocation3], 1

</llo_original>
